<compile_context>
chip_gen: v7x
topology: tpu7x:2x2x1
jax: 0.10.0
libtpu: 0.0.40
codegen_flags: <defaults>
</compile_context>

<pallas_src>
import functools
import itertools

import numpy as np
import jax
import jax.numpy as jnp
from jax.experimental import pallas as pl
from jax.experimental.pallas import tpu as pltpu


# ---------------------------------------------------------------------------
# Kernel: fused LayerNorm(Cin) + reduction GEMM (Cin -> Cout) over TM rows.
# ---------------------------------------------------------------------------
def _patch_merge_kernel(x_ref, gamma_ref, beta_ref, w_ref, o_ref, *, eps, mxu_dtype):
    # x_ref:      (TM, Cin)   merged-patch rows
    # gamma/beta: (1,  Cin)   LayerNorm affine parameters
    # w_ref:      (Cin, Cout) reduction weight, stored (in, out) = W^T of nn.Linear
    # o_ref:      (TM, Cout)
    x = x_ref[...].astype(jnp.float32)
    cin = x.shape[-1]
    inv_n = 1.0 / cin

    # One-pass LayerNorm stats: the two lane reductions are independent.
    s1 = jnp.sum(x, axis=-1, keepdims=True)
    s2 = jnp.sum(x * x, axis=-1, keepdims=True)
    mean = s1 * inv_n
    var = s2 * inv_n - mean * mean
    inv = jax.lax.rsqrt(var + eps)

    y = (x - mean) * inv * gamma_ref[...].astype(jnp.float32) \
        + beta_ref[...].astype(jnp.float32)

    # Reduction GEMM on the MXU, bf16 operands by default, f32 accumulate.
    o_ref[...] = jnp.dot(
        y.astype(mxu_dtype),
        w_ref[...].astype(mxu_dtype),
        preferred_element_type=jnp.float32,
    ).astype(o_ref.dtype)


# ---------------------------------------------------------------------------
# Wrapper-side parity merge (free reshapes + one transpose pass under jit).
# ---------------------------------------------------------------------------
def _merge_3d(x):
    b, d, h, w, c = x.shape
    x = jnp.pad(x, ((0, 0), (0, d % 2), (0, h % 2), (0, w % 2), (0, 0)))
    b, d, h, w, c = x.shape
    d2, h2, w2 = d // 2, h // 2, w // 2
    # channel group index i*4 + j*2 + k matches torch.cat(itertools.product).
    xm = x.reshape(b, d2, 2, h2, 2, w2, 2, c)
    xm = xm.transpose(0, 1, 3, 5, 2, 4, 6, 7)
    return xm.reshape(b, d2, h2, w2, 8 * c)


def _merge_2d(x):
    b, h, w, c = x.shape
    x = jnp.pad(x, ((0, 0), (0, h % 2), (0, w % 2), (0, 0)))
    b, h, w, c = x.shape
    h2, w2 = h // 2, w // 2
    # torch order: concat over product(i, j) of x[:, j::2, i::2, :]
    # -> channel group index i*2 + j (i = w-parity, j = h-parity).
    xm = x.reshape(b, h2, 2, w2, 2, c)          # (b, h2, j, w2, i, c)
    xm = xm.transpose(0, 1, 3, 4, 2, 5)         # (b, h2, w2, i, j, c)
    return xm.reshape(b, h2, w2, 4 * c)


# ---------------------------------------------------------------------------
# Tile-size / VMEM-budget selection (per TPU generation).
# ---------------------------------------------------------------------------
def _round_up(x, m):
    return (x + m - 1) // m * m


def _vmem_budget_bytes():
    cap = 128 << 20
    try:
        info = pltpu.get_tpu_info()
        cap = int(getattr(info, "vmem_capacity_bytes", cap)) or cap
    except Exception:
        pass
    # Leave headroom: ~96-100 MiB on v5e/v6e (128 MiB), ~48 MiB on v7x (64 MiB).
    return min((cap * 3) // 4, 100 << 20)


def _pick_tile_m(m, c_in, c_out, io_itemsize, w_itemsize, vmem_budget, min_steps=4):
    # Constants (gamma, beta, W) keep a constant block index (no re-DMA across
    # steps) but Pallas still reserves two buffers each -> charge them doubled.
    const_bytes = 2 * (c_in * c_out + 2 * c_in) * w_itemsize
    tile = 128
    for cand in (256, 512, 1024, 2048):
        io = 2 * cand * (c_in + c_out) * io_itemsize   # double-buffered x/out tiles
        scratch = 2 * cand * (c_in + c_out) * 4        # f32 intermediates headroom
        if const_bytes + io + scratch <= vmem_budget:
            tile = cand
    # Keep >= min_steps grid steps (megacore / pipelining), never below 128 rows.
    tile = min(tile, max(128, _round_up(pl.cdiv(m, min_steps), 128)))
    return int(tile)


# ---------------------------------------------------------------------------
# Public forward.
# ---------------------------------------------------------------------------
def patch_merging_v2(x, gamma, beta, w_red, *, eps=1e-5, mxu_dtype=jnp.bfloat16):
    """PatchMergingV2 forward.

    x:      (B, D, H, W, C) for spatial_dims=3 or (B, H, W, C) for spatial_dims=2
    gamma:  (8C,) / (4C,)   LayerNorm weight
    beta:   (8C,) / (4C,)   LayerNorm bias
    w_red:  (8C, 2C) / (4C, 2C)  reduction weight stored as (in, out) = W^T
    """
    if x.ndim == 5:
        merged = _merge_3d(x)
    elif x.ndim == 4:
        merged = _merge_2d(x)
    else:
        raise NotImplementedError("PatchMergingV2 expects a 4-D or 5-D input")

    *lead, c_in = merged.shape
    rows = merged.reshape(-1, c_in)                    # lane-dense (M, Cin), free
    m = rows.shape[0]

    gamma = gamma.reshape(1, c_in)
    beta = beta.reshape(1, c_in)

    # Lane-dense output guard: pad the weight's N dim to a multiple of 128.
    c_out = w_red.shape[1]
    c_out_p = _round_up(max(c_out, 128), 128)
    if c_out_p != c_out:
        w_red = jnp.pad(w_red, ((0, 0), (0, c_out_p - c_out)))

    io_itemsize = jnp.dtype(x.dtype).itemsize
    w_itemsize = jnp.dtype(w_red.dtype).itemsize
    budget = _vmem_budget_bytes()
    tile_m = _pick_tile_m(m, c_in, c_out_p, io_itemsize, w_itemsize, budget)
    grid = (pl.cdiv(m, tile_m),)                       # ragged last block is masked

    kernel = functools.partial(_patch_merge_kernel, eps=eps, mxu_dtype=mxu_dtype)
    out = pl.pallas_call(
        kernel,
        out_shape=jax.ShapeDtypeStruct((m, c_out_p), x.dtype),
        grid_spec=pltpu.PrefetchScalarGridSpec(
            num_scalar_prefetch=0,
            grid=grid,
            in_specs=[
                pl.BlockSpec((tile_m, c_in), lambda i: (i, 0)),     # merged rows
                pl.BlockSpec((1, c_in), lambda i: (0, 0)),          # gamma (resident)
                pl.BlockSpec((1, c_in), lambda i: (0, 0)),          # beta  (resident)
                pl.BlockSpec((c_in, c_out_p), lambda i: (0, 0)),    # reduction weight
            ],
            out_specs=pl.BlockSpec((tile_m, c_out_p), lambda i: (i, 0)),
        ),
        compiler_params=pltpu.CompilerParams(
            dimension_semantics=("parallel",),
            vmem_limit_bytes=int(budget),
        ),
    )(rows, gamma, beta, w_red)

    if c_out_p != c_out:
        out = out[:, :c_out]
    return out.reshape(*lead, c_out)


# ---------------------------------------------------------------------------
# Plain-JAX reference (direct transcription of the PyTorch forward).
# ---------------------------------------------------------------------------
def _reference(x, gamma, beta, w_red, eps=1e-5):
    gamma = gamma.reshape(-1)
    beta = beta.reshape(-1)
    if x.ndim == 5:
        b, d, h, w, c = x.shape
        x = jnp.pad(x, ((0, 0), (0, d % 2), (0, h % 2), (0, w % 2), (0, 0)))
        parts = [x[:, i::2, j::2, k::2, :]
                 for i, j, k in itertools.product(range(2), range(2), range(2))]
    else:
        b, h, w, c = x.shape
        x = jnp.pad(x, ((0, 0), (0, h % 2), (0, w % 2), (0, 0)))
        parts = [x[:, j::2, i::2, :]
                 for i, j in itertools.product(range(2), range(2))]
    xc = jnp.concatenate(parts, axis=-1)
    mean = xc.mean(-1, keepdims=True)
    var = ((xc - mean) ** 2).mean(-1, keepdims=True)
    xn = (xc - mean) / jnp.sqrt(var + eps) * gamma + beta
    return jnp.dot(xn, w_red, precision=jax.lax.Precision.HIGHEST)


if __name__ == "__main__":
    key = jax.random.PRNGKey(0)
    k1, k2, k3, k4, k5, k6, k7, k8 = jax.random.split(key, 8)
    fwd = jax.jit(patch_merging_v2)

    # ---- spatial_dims=3 path (module default); odd D / W exercise padding ----
    dim = 64
    b, d, h, w = 2, 9, 8, 7                    # merged tokens M = 2*5*4*4 = 160
    c8, c2 = 8 * dim, 2 * dim                  # 512 -> 128 (lane-dense output)
    x3 = jax.random.normal(k1, (b, d, h, w, dim), jnp.float32)
    g3 = 1.0 + 0.1 * jax.random.normal(k2, (c8,), jnp.float32)
    b3 = 0.1 * jax.random.normal(k3, (c8,), jnp.float32)
    w3 = 0.05 * jax.random.normal(k4, (c8, c2), jnp.float32)

    out3 = jax.block_until_ready(fwd(x3, g3, b3, w3))
    ref3 = _reference(x3, g3, b3, w3)
    # bf16 MXU operands (f32 accumulate) -> loosened tolerance vs f32 reference.
    np.testing.assert_allclose(np.asarray(out3), np.asarray(ref3), atol=2e-2, rtol=2e-2)

    # ---- spatial_dims=2 path; output channels < 128 exercise the lane pad ----
    dim2 = 32
    x2 = jax.random.normal(k5, (2, 9, 8, dim2), jnp.float32)
    c4, c2b = 4 * dim2, 2 * dim2               # 128 -> 64 (padded to 128 inside)
    g2 = 1.0 + 0.1 * jax.random.normal(k6, (c4,), jnp.float32)
    bb2 = 0.1 * jax.random.normal(k7, (c4,), jnp.float32)
    w2 = 0.05 * jax.random.normal(k8, (c4, c2b), jnp.float32)

    out2 = jax.block_until_ready(fwd(x2, g2, bb2, w2))
    ref2 = _reference(x2, g2, bb2, w2)
    np.testing.assert_allclose(np.asarray(out2), np.asarray(ref2), atol=2e-2, rtol=2e-2)

    print("KERNEL_OK")
</pallas_src>

<mosaic_0001>
module attributes {stable_mosaic.version = 11 : i64} {
  func.func @_patch_merge_kernel(%arg0: i32, %arg1: memref<128x512xf32, #tpu.memory_space<vmem>>, %arg2: memref<1x512xf32, #tpu.memory_space<vmem>>, %arg3: memref<1x512xf32, #tpu.memory_space<vmem>>, %arg4: memref<512x128xf32, #tpu.memory_space<vmem>>, %arg5: memref<128x128xf32, #tpu.memory_space<vmem>>) attributes {dimension_semantics = [#tpu.dimension_semantics<parallel>], iteration_bounds = array<i64: 2>, scalar_prefetch = 0 : i64, scratch_operands = 0 : i64, tpu.core_type = #tpu.core_type<tc>, window_params = [{transform_indices = @transform_0, window_bounds = array<i64: 128, 512>}, {pipeline_mode = #tpu.pipeline_mode<synchronous>, transform_indices = @transform_1, window_bounds = array<i64: 1, 512>}, {pipeline_mode = #tpu.pipeline_mode<synchronous>, transform_indices = @transform_2, window_bounds = array<i64: 1, 512>}, {pipeline_mode = #tpu.pipeline_mode<synchronous>, transform_indices = @transform_3, window_bounds = array<i64: 512, 128>}, {transform_indices = @transform_4, window_bounds = array<i64: 128, 128>}]} {
    %c0 = arith.constant 0 : index
    %c0_0 = arith.constant 0 : index
    %0 = vector.load %arg1[%c0, %c0_0] : memref<128x512xf32, #tpu.memory_space<vmem>>, vector<128x512xf32>
    %cst = arith.constant dense<0.000000e+00> : vector<128xf32>
    %1 = vector.multi_reduction <add>, %0, %cst [1] : vector<128x512xf32> to vector<128xf32>
    %2 = vector.shape_cast %1 : vector<128xf32> to vector<128x1xf32>
    %3 = arith.mulf %0, %0 : vector<128x512xf32>
    %cst_1 = arith.constant dense<0.000000e+00> : vector<128xf32>
    %4 = vector.multi_reduction <add>, %3, %cst_1 [1] : vector<128x512xf32> to vector<128xf32>
    %5 = vector.shape_cast %4 : vector<128xf32> to vector<128x1xf32>
    %cst_2 = arith.constant 0.001953125 : f32
    %6 = vector.broadcast %cst_2 : f32 to vector<128x1xf32>
    %7 = arith.mulf %2, %6 : vector<128x1xf32>
    %cst_3 = arith.constant 0.001953125 : f32
    %8 = vector.broadcast %cst_3 : f32 to vector<128x1xf32>
    %9 = arith.mulf %5, %8 : vector<128x1xf32>
    %10 = arith.mulf %7, %7 : vector<128x1xf32>
    %11 = arith.subf %9, %10 : vector<128x1xf32>
    %cst_4 = arith.constant 9.99999974E-6 : f32
    %12 = vector.broadcast %cst_4 : f32 to vector<128x1xf32>
    %13 = arith.addf %11, %12 : vector<128x1xf32>
    %14 = math.rsqrt %13 : vector<128x1xf32>
    %15 = vector.broadcast %7 : vector<128x1xf32> to vector<128x512xf32>
    %16 = arith.subf %0, %15 : vector<128x512xf32>
    %17 = vector.broadcast %14 : vector<128x1xf32> to vector<128x512xf32>
    %18 = arith.mulf %16, %17 : vector<128x512xf32>
    %c0_5 = arith.constant 0 : index
    %c0_6 = arith.constant 0 : index
    %19 = vector.load %arg2[%c0_5, %c0_6] : memref<1x512xf32, #tpu.memory_space<vmem>>, vector<1x512xf32>
    %20 = vector.broadcast %19 : vector<1x512xf32> to vector<128x512xf32>
    %21 = arith.mulf %18, %20 : vector<128x512xf32>
    %c0_7 = arith.constant 0 : index
    %c0_8 = arith.constant 0 : index
    %22 = vector.load %arg3[%c0_7, %c0_8] : memref<1x512xf32, #tpu.memory_space<vmem>>, vector<1x512xf32>
    %23 = vector.broadcast %22 : vector<1x512xf32> to vector<128x512xf32>
    %24 = arith.addf %21, %23 : vector<128x512xf32>
    %25 = arith.truncf %24 : vector<128x512xf32> to vector<128x512xbf16>
    %c0_9 = arith.constant 0 : index
    %c0_10 = arith.constant 0 : index
    %26 = vector.load %arg4[%c0_9, %c0_10] : memref<512x128xf32, #tpu.memory_space<vmem>>, vector<512x128xf32>
    %27 = arith.truncf %26 : vector<512x128xf32> to vector<512x128xbf16>
    %cst_11 = arith.constant dense<0.000000e+00> : vector<128x128xf32>
    %28 = tpu.matmul %25, %27, %cst_11 {dimension_numbers = #tpu.dot_dimension_numbers<[1], [0], [0], [1], [0, 0, 1, 1], [], []>} : vector<128x512xbf16>, vector<512x128xbf16>, vector<128x128xf32> -> vector<128x128xf32>
    %c0_12 = arith.constant 0 : index
    %c0_13 = arith.constant 0 : index
    %29 = vector.load %arg5[%c0_12, %c0_13] : memref<128x128xf32, #tpu.memory_space<vmem>>, vector<128x128xf32>
    tpu.vector_store %arg5[%c0_12, %c0_13], %28 {strides = array<i32>} : memref<128x128xf32, #tpu.memory_space<vmem>>, vector<128x128xf32>,
    return
  }
  func.func @transform_0(%arg0: i32) -> (i32, i32) {
    %c0_i32 = arith.constant 0 : i32
    %c0_i32_0 = arith.constant 0 : i32
    return %arg0, %c0_i32 : i32, i32
  }
  func.func @transform_1(%arg0: i32) -> (i32, i32) {
    %c0_i32 = arith.constant 0 : i32
    %c0_i32_0 = arith.constant 0 : i32
    %c0_i32_1 = arith.constant 0 : i32
    return %c0_i32, %c0_i32_0 : i32, i32
  }
  func.func @transform_2(%arg0: i32) -> (i32, i32) {
    %c0_i32 = arith.constant 0 : i32
    %c0_i32_0 = arith.constant 0 : i32
    %c0_i32_1 = arith.constant 0 : i32
    return %c0_i32, %c0_i32_0 : i32, i32
  }
  func.func @transform_3(%arg0: i32) -> (i32, i32) {
    %c0_i32 = arith.constant 0 : i32
    %c0_i32_0 = arith.constant 0 : i32
    %c0_i32_1 = arith.constant 0 : i32
    return %c0_i32, %c0_i32_0 : i32, i32
  }
  func.func @transform_4(%arg0: i32) -> (i32, i32) {
    %c0_i32 = arith.constant 0 : i32
    %c0_i32_0 = arith.constant 0 : i32
    return %arg0, %c0_i32 : i32, i32
  }
}

</mosaic_0001>

<llo_original>
// kernel: patch_merging_v2.1
$region0: #{patch_merging_v2.1}
  #allocation0 [shape = 'u32[]', space=smem, size = 0x4, offset = 0x4, fixed_abs, tag = 'smem constant byte address 0x4 - core index']
  #allocation1 [shape = 'u32[144,128]{1,0:T(1,128)}', space=vmem, size = 0x12000, scoped, tag = 'internal scratch']
  %s0 = inlined_call_operand.hbm [shape: f32[160,512], index: 0, kind: input, shape index: {}]
  %s1 = inlined_call_operand.hbm [shape: f32[1,512], index: 1, kind: input, shape index: {}]
  %s2 = inlined_call_operand.hbm [shape: f32[1,512], index: 2, kind: input, shape index: {}]
  %s3 = inlined_call_operand.hbm [shape: f32[512,128], index: 3, kind: input, shape index: {}]
  %s4 = inlined_call_operand.hbm [shape: f32[160,128], index: 4, kind: output, shape index: {}]
  %s5 = sld [smem:[#allocation0]]
  $region65: #{patch_merging_v2.1} parent=0
    _
  %s7 = ssub.s32 1, %s5
  %s8 = scalar_select 0, %s7, %s5
  $region1: #{patch_merging_v2.1} parent=0
    #allocation2 [shape = 'u8[524288]{0}', space=vmem, size = 0x80000, scoped, tag = 'input window, operand 0']
    #allocation3 [shape = 's32[2]{0}', space=sflag, size = 0x8, scoped, tag = 'scoped memory for patch_merging_v2.1']
    #allocation4 [shape = 's32[2]{0}', space=sflag, size = 0x8, scoped, tag = 'scoped memory for patch_merging_v2.1']
    #allocation5 [shape = 'u8[2048]{0}', space=vmem, size = 0x800, scoped, tag = 'input window, operand 1, single buffered']
    #allocation6 [shape = 's32[1]{0}', space=sflag, size = 0x4, scoped, tag = 'scoped memory for patch_merging_v2.1']
    #allocation7 [shape = 'u8[2048]{0}', space=vmem, size = 0x800, scoped, tag = 'input window, operand 2, single buffered']
    #allocation8 [shape = 'u8[262144]{0}', space=vmem, size = 0x40000, scoped, tag = 'input window, operand 3, single buffered']
    #allocation9 [shape = 's32[1]{0}', space=sflag, size = 0x4, scoped, tag = 'scoped memory for patch_merging_v2.1']
    #allocation10 [shape = 'u8[131072]{0}', space=vmem, size = 0x20000, scoped, tag = 'output window, operand 0']
    %9 = vsyncpa [#allocation3], 0
    %s10 = scalar_lea.sflag [#allocation3], 1
    %11 = vsyncpa %s10, 0
    %12 = vsyncpa [#allocation6], 0
    %13 = vsyncpa [#allocation9], 0
    %14 = vsyncpa [#allocation4], 0
    %s15 = scalar_lea.sflag [#allocation4], 1
    %16 = vsyncpa %s15, 0
    loop: start=0, step=1, limit=4
    $region2: #{patch_merging_v2.1} parent=1 // loop_pre_header
      _
    $region3: #{patch_merging_v2.1} parent=1 // loop_header
      %s18 = sphi 0, %s22
      %p19 = scmp.ge.s32.totalorder %s18, 4
      %s28 = sphi 0, %s30
      %s31 = sphi 0, %s28
      %s32 = sphi 0, %s31
      %s48 = sphi 0, %s32
      %s52 = sphi 0, %s52
      %s54 = sphi 0, %s52
      %s55 = sphi 0, %s54
      %s69 = sphi 0, %s55
      %s73 = sphi 0, %s73
      %s75 = sphi 0, %s73
      %s76 = sphi 0, %s75
      %s90 = sphi 0, %s76
      %s94 = sphi 0, %s94
      %s96 = sphi 0, %s94
      %s97 = sphi 0, %s96
      %s111 = sphi 0, %s97
      %s117 = sphi 0, %s119
      %s120 = sphi 0, %s117
      %s121 = sphi 0, %s120
      %s137 = sphi 0, %s121
    $region4: #{patch_merging_v2.1} parent=1 // loop_header_branch
      %21 = sbr.rel (%p19) target = $region8
    $region5: #{patch_merging_v2.1} parent=1 // loop_body
      %s23 = ssub.s32 %s18, 1
      %s24 = ssub.s32 %s18, 2
      %s25 = sadd.s32 %s18, 1
      %s26 = ssub.s32 %s18, %s25
      %p27 = scmp.eq.s32.totalorder %s26, 0
      %s29 = sadd.s32 %s28, 1
      %s30 = scalar_select %p27, %s28, %s29
      %p33 = pneg %p27
      %p34 = scmp.eq.s32.totalorder %s18, 1
      %p35 = por %p33, %p34
      %p36 = scmp.ne.s32.totalorder %s28, %s31
      %p37 = scmp.eq.s32.totalorder %s18, 0
      %p38 = por %p36, %p37
      %p39 = scmp.ne.s32.totalorder %s28, %s31
      %p40 = scmp.eq.s32.totalorder %s23, 1
      %p41 = por %p39, %p40
      %p42 = scmp.ne.s32.totalorder %s31, %s32
      %p43 = scmp.eq.s32.totalorder %s23, 0
      %p44 = por %p42, %p43
      %p45 = scmp.ne.s32.totalorder %s31, %s32
      %p46 = scmp.eq.s32.totalorder %s24, 1
      %p47 = por %p45, %p46
      %p49 = scmp.ne.s32.totalorder %s32, %s48
      %p50 = scmp.eq.s32.totalorder %s24, 0
      %p51 = por %p49, %p50
      %s53 = sadd.s32 %s52, 1
      %p56 = scmp.eq.s32.totalorder %s18, 1
      %p57 = scmp.ne.s32.totalorder %s52, %s54
      %p58 = scmp.eq.s32.totalorder %s18, 0
      %p59 = por %p57, %p58
      %p60 = scmp.ne.s32.totalorder %s52, %s54
      %p61 = scmp.eq.s32.totalorder %s23, 1
      %p62 = por %p60, %p61
      %p63 = scmp.ne.s32.totalorder %s54, %s55
      %p64 = scmp.eq.s32.totalorder %s23, 0
      %p65 = por %p63, %p64
      %p66 = scmp.ne.s32.totalorder %s54, %s55
      %p67 = scmp.eq.s32.totalorder %s24, 1
      %p68 = por %p66, %p67
      %p70 = scmp.ne.s32.totalorder %s55, %s69
      %p71 = scmp.eq.s32.totalorder %s24, 0
      %p72 = por %p70, %p71
      %s74 = sadd.s32 %s73, 1
      %p77 = scmp.eq.s32.totalorder %s18, 1
      %p78 = scmp.ne.s32.totalorder %s73, %s75
      %p79 = scmp.eq.s32.totalorder %s18, 0
      %p80 = por %p78, %p79
      %p81 = scmp.ne.s32.totalorder %s73, %s75
      %p82 = scmp.eq.s32.totalorder %s23, 1
      %p83 = por %p81, %p82
      %p84 = scmp.ne.s32.totalorder %s75, %s76
      %p85 = scmp.eq.s32.totalorder %s23, 0
      %p86 = por %p84, %p85
      %p87 = scmp.ne.s32.totalorder %s75, %s76
      %p88 = scmp.eq.s32.totalorder %s24, 1
      %p89 = por %p87, %p88
      %p91 = scmp.ne.s32.totalorder %s76, %s90
      %p92 = scmp.eq.s32.totalorder %s24, 0
      %p93 = por %p91, %p92
      %s95 = sadd.s32 %s94, 1
      %p98 = scmp.eq.s32.totalorder %s18, 1
      %p99 = scmp.ne.s32.totalorder %s94, %s96
      %p100 = scmp.eq.s32.totalorder %s18, 0
      %p101 = por %p99, %p100
      %p102 = scmp.ne.s32.totalorder %s94, %s96
      %p103 = scmp.eq.s32.totalorder %s23, 1
      %p104 = por %p102, %p103
      %p105 = scmp.ne.s32.totalorder %s96, %s97
      %p106 = scmp.eq.s32.totalorder %s23, 0
      %p107 = por %p105, %p106
      %p108 = scmp.ne.s32.totalorder %s96, %s97
      %p109 = scmp.eq.s32.totalorder %s24, 1
      %p110 = por %p108, %p109
      %p112 = scmp.ne.s32.totalorder %s97, %s111
      %p113 = scmp.eq.s32.totalorder %s24, 0
      %p114 = por %p112, %p113
      %s115 = ssub.s32 %s18, %s25
      %p116 = scmp.eq.s32.totalorder %s115, 0
      %s118 = sadd.s32 %s117, 1
      %s119 = scalar_select %p116, %s117, %s118
      %p122 = pneg %p116
      %p123 = scmp.eq.s32.totalorder %s18, 1
      %p124 = por %p122, %p123
      %p125 = scmp.ne.s32.totalorder %s117, %s120
      %p126 = scmp.eq.s32.totalorder %s18, 0
      %p127 = por %p125, %p126
      %p128 = scmp.ne.s32.totalorder %s117, %s120
      %p129 = scmp.eq.s32.totalorder %s23, 1
      %p130 = por %p128, %p129
      %p131 = scmp.ne.s32.totalorder %s120, %s121
      %p132 = scmp.eq.s32.totalorder %s23, 0
      %p133 = por %p131, %p132
      %p134 = scmp.ne.s32.totalorder %s120, %s121
      %p135 = scmp.eq.s32.totalorder %s24, 1
      %p136 = por %p134, %p135
      %p138 = scmp.ne.s32.totalorder %s121, %s137
      %p139 = scmp.eq.s32.totalorder %s24, 0
      %p140 = por %p138, %p139
      %p141 = scmp.le.s32.totalorder 1, %s18
      %p142 = scmp.lt.s32.totalorder %s18, 3
      %p143 = pnand %p141, %p142
      %p144 = pneg %p143
      // Predicated region
      $region9: #{patch_merging_v2.1} parent=5 // pred_check
        _
      $region10: #{patch_merging_v2.1} parent=5 // pred_check_branch
        %146 = sbr.rel (%p143) target = $region12
      $region11: #{patch_merging_v2.1} parent=5 // pred_region
        %s147 = ssub.s32 %s18, 1
        // Predicated region
        $region13: #{patch_merging_v2.1} parent=11 // pred_check
          %p148 = pneg %p65
        $region14: #{patch_merging_v2.1} parent=11 // pred_check_branch
          %150 = sbr.rel (%p148) target = $region16
        $region15: #{patch_merging_v2.1} parent=11 // pred_region
          %s152 = ssub.s32 64, 64
          %153 = vsyncadd [#allocation6], %s152
          %s155 = sshll.u32 [#allocation5], 4
          %s156 = int_to_ptr.vmem [resolvable:$true] %s155
          %158 = dma.hbm_to_vmem [thread:$0]  %s1, 64, %s156, [#allocation6]
        $region16: #{patch_merging_v2.1} parent=11 // pred_fallthru
          _
        // Predicated region
        $region17: #{patch_merging_v2.1} parent=11 // pred_check
          %p159 = pneg %p86
        $region18: #{patch_merging_v2.1} parent=11 // pred_check_branch
          %161 = sbr.rel (%p159) target = $region20
        $region19: #{patch_merging_v2.1} parent=11 // pred_region
          %s163 = ssub.s32 64, 64
          %164 = vsyncadd [#allocation6], %s163
          %s166 = sshll.u32 [#allocation7], 4
          %s167 = int_to_ptr.vmem [resolvable:$true] %s166
          %169 = dma.hbm_to_vmem [thread:$0]  %s2, 64, %s167, [#allocation6]
        $region20: #{patch_merging_v2.1} parent=11 // pred_fallthru
          _
        // Predicated region
        $region21: #{patch_merging_v2.1} parent=11 // pred_check
          %p170 = pneg %p107
        $region22: #{patch_merging_v2.1} parent=11 // pred_check_branch
          %172 = sbr.rel (%p170) target = $region24
        $region23: #{patch_merging_v2.1} parent=11 // pred_region
          %s174 = ssub.s32 8192, 8192
          %175 = vsyncadd [#allocation9], %s174
          %s176 = sshll.u32 [#allocation8], 4
          %s177 = int_to_ptr.vmem [resolvable:$true] %s176
          %182 = dma.hbm_to_vmem [thread:$0]  %s3, 8192, %s177, [#allocation9], 128, 128, 8
        $region24: #{patch_merging_v2.1} parent=11 // pred_fallthru
          _
      $region12: #{patch_merging_v2.1} parent=5 // pred_fallthru
        _
      %p183 = scmp.lt.s32.totalorder %s18, 2
      // Predicated region
      $region25: #{patch_merging_v2.1} parent=5 // pred_check
        %p184 = pneg %p183
      $region26: #{patch_merging_v2.1} parent=5 // pred_check_branch
        %186 = sbr.rel (%p184) target = $region28
      $region27: #{patch_merging_v2.1} parent=5 // pred_region
        // Predicated region
        $region29: #{patch_merging_v2.1} parent=27 // pred_check
          %p187 = pneg %p38
        $region30: #{patch_merging_v2.1} parent=27 // pred_check_branch
          %189 = sbr.rel (%p187) target = $region32
        $region31: #{patch_merging_v2.1} parent=27 // pred_region
          %s190 = sand.u32 %s28, 1
          %s191 = scalar_lea.sflag [#allocation3], %s190
          %s192 = sand.u32 %s28, 1
          %s193 = smul.addr %s192, 512
          %s194 = scalar_lea.vmem [#allocation2], %s193
          %s195 = smul.u32 16, %s18
          %s196 = ssub.s32 20, %s195
          %p197 = scmp.lt.s32.totalorder %s196, 16
          %s198 = scalar_select %p197, %s196, 16
          %s199 = smul.u32 128, %s198
          %s200 = smul.u32 %s199, 4
          %s202 = ssub.s32 8192, %s200
          %203 = vsyncadd %s191, %s202
          %p204 = scmp.ne.s32.totalorder 0, %s200
          %s205 = smul.addr %s195, 4
          %s206 = smul.addr %s205, 128
          %s207 = scalar_lea.hbm %s0, %s206
          %s208 = smul.u32 32, %s198
          %s209 = sshll.u32 %s194, 4
          %s210 = int_to_ptr.vmem [resolvable:$true] %s209
          %s211 = sshll.u32 %s208, 4
          %215 = dma.hbm_to_vmem [thread:$0]  (%p204), %s207, %s211, %s210, %s191, 512, 512, 32
        $region32: #{patch_merging_v2.1} parent=27 // pred_fallthru
          _
      $region28: #{patch_merging_v2.1} parent=5 // pred_fallthru
        _
      %p216 = scmp.le.s32.totalorder 1, %s18
      %p217 = scmp.lt.s32.totalorder %s18, 3
      %p218 = pnand %p216, %p217
      %p219 = pneg %p218
      // Predicated region
      $region33: #{patch_merging_v2.1} parent=5 // pred_check
        _
      $region34: #{patch_merging_v2.1} parent=5 // pred_check_branch
        %221 = sbr.rel (%p218) target = $region36
      $region35: #{patch_merging_v2.1} parent=5 // pred_region
        %s222 = ssub.s32 %s18, 1
        %s223 = sand.u32 %s31, 1
        %s224 = scalar_lea.sflag [#allocation3], %s223
        %s225 = sand.u32 %s31, 1
        %s226 = smul.addr %s225, 512
        %s227 = scalar_lea.vmem [#allocation2], %s226
        // Predicated region
        $region37: #{patch_merging_v2.1} parent=35 // pred_check
          %p228 = pneg %p44
        $region38: #{patch_merging_v2.1} parent=35 // pred_check_branch
          %230 = sbr.rel (%p228) target = $region40
        $region39: #{patch_merging_v2.1} parent=35 // pred_region
          %231 = dma.done %s224, 8192
        $region40: #{patch_merging_v2.1} parent=35 // pred_fallthru
          _
        // Predicated region
        $region41: #{patch_merging_v2.1} parent=35 // pred_check
          %p232 = pneg %p65
        $region42: #{patch_merging_v2.1} parent=35 // pred_check_branch
          %234 = sbr.rel (%p232) target = $region44
        $region43: #{patch_merging_v2.1} parent=35 // pred_region
          %235 = dma.done [#allocation6], 64
        $region44: #{patch_merging_v2.1} parent=35 // pred_fallthru
          _
        // Predicated region
        $region45: #{patch_merging_v2.1} parent=35 // pred_check
          %p236 = pneg %p86
        $region46: #{patch_merging_v2.1} parent=35 // pred_check_branch
          %238 = sbr.rel (%p236) target = $region48
        $region47: #{patch_merging_v2.1} parent=35 // pred_region
          %239 = dma.done [#allocation6], 64
        $region48: #{patch_merging_v2.1} parent=35 // pred_fallthru
          _
        // Predicated region
        $region49: #{patch_merging_v2.1} parent=35 // pred_check
          %p240 = pneg %p107
        $region50: #{patch_merging_v2.1} parent=35 // pred_check_branch
          %242 = sbr.rel (%p240) target = $region52
        $region51: #{patch_merging_v2.1} parent=35 // pred_region
          %243 = dma.done [#allocation9], 8192
        $region52: #{patch_merging_v2.1} parent=35 // pred_fallthru
          _
        %s244 = sand.u32 %s31, 1
        %s245 = scalar_lea.sflag [#allocation3], %s244
        %s246 = sand.u32 %s31, 1
        %s247 = smul.addr %s246, 512
        %s248 = scalar_lea.vmem [#allocation2], %s247
        %p249 = pneg %p44
        %p250 = pneg %p41
        %p251 = pneg %p65
        %p252 = pneg %p62
        %p253 = pneg %p86
        %p254 = pneg %p83
        %p255 = pneg %p107
        %p256 = pneg %p104
        %p257 = pneg %p133
        %p258 = pneg %p130
        %s259 = sand.u32 %s120, 1
        %s260 = scalar_lea.sflag [#allocation4], %s259
        %s261 = sand.u32 %s120, 1
        %s262 = smul.addr %s261, 128
        %s263 = scalar_lea.vmem [#allocation10], %s262
        %s264 = smul.u32 16, %s23
        %s265 = ssub.s32 20, %s264
        %p266 = scmp.lt.s32.totalorder %s265, 16
        %s267 = scalar_select %p266, %s265, 16
        %s268 = smul.u32 128, %s267
        %s269 = smul.u32 %s268, 4
        %s270 = smul.u32 16, %s23
        %s271 = ssub.s32 20, %s270
        %p272 = scmp.lt.s32.totalorder %s271, 16
        %s273 = scalar_select %p272, %s271, 16
        %s274 = smul.u32 128, %s273
        %v276 = vld [vmem:[%s227] sm:$0xff]
        %v277 = vld [vmem:[%s227 + $0x8] sm:$0xff]
        %v278 = vld [vmem:[%s227 + $0x10] sm:$0xff]
        %v279 = vld [vmem:[%s227 + $0x18] sm:$0xff]
        %v280 = vld [vmem:[%s227 + $0x20] sm:$0xff]
        %v281 = vld [vmem:[%s227 + $0x28] sm:$0xff]
        %v282 = vld [vmem:[%s227 + $0x30] sm:$0xff]
        %v283 = vld [vmem:[%s227 + $0x38] sm:$0xff]
        %v284 = vld [vmem:[%s227 + $0x40] sm:$0xff]
        %v285 = vld [vmem:[%s227 + $0x48] sm:$0xff]
        %v286 = vld [vmem:[%s227 + $0x50] sm:$0xff]
        %v287 = vld [vmem:[%s227 + $0x58] sm:$0xff]
        %v288 = vld [vmem:[%s227 + $0x60] sm:$0xff]
        %v289 = vld [vmem:[%s227 + $0x68] sm:$0xff]
        %v290 = vld [vmem:[%s227 + $0x70] sm:$0xff]
        %v291 = vld [vmem:[%s227 + $0x78] sm:$0xff]
        %v292 = vld [vmem:[%s227 + $0x80] sm:$0xff]
        %v293 = vld [vmem:[%s227 + $0x88] sm:$0xff]
        %v294 = vld [vmem:[%s227 + $0x90] sm:$0xff]
        %v295 = vld [vmem:[%s227 + $0x98] sm:$0xff]
        %v296 = vld [vmem:[%s227 + $0xa0] sm:$0xff]
        %v297 = vld [vmem:[%s227 + $0xa8] sm:$0xff]
        %v298 = vld [vmem:[%s227 + $0xb0] sm:$0xff]
        %v299 = vld [vmem:[%s227 + $0xb8] sm:$0xff]
        %v300 = vld [vmem:[%s227 + $0xc0] sm:$0xff]
        %v301 = vld [vmem:[%s227 + $0xc8] sm:$0xff]
        %v302 = vld [vmem:[%s227 + $0xd0] sm:$0xff]
        %v303 = vld [vmem:[%s227 + $0xd8] sm:$0xff]
        %v304 = vld [vmem:[%s227 + $0xe0] sm:$0xff]
        %v305 = vld [vmem:[%s227 + $0xe8] sm:$0xff]
        %v306 = vld [vmem:[%s227 + $0xf0] sm:$0xff]
        %v307 = vld [vmem:[%s227 + $0xf8] sm:$0xff]
        %v308 = vld [vmem:[%s227 + $0x100] sm:$0xff]
        %v309 = vld [vmem:[%s227 + $0x108] sm:$0xff]
        %v310 = vld [vmem:[%s227 + $0x110] sm:$0xff]
        %v311 = vld [vmem:[%s227 + $0x118] sm:$0xff]
        %v312 = vld [vmem:[%s227 + $0x120] sm:$0xff]
        %v313 = vld [vmem:[%s227 + $0x128] sm:$0xff]
        %v314 = vld [vmem:[%s227 + $0x130] sm:$0xff]
        %v315 = vld [vmem:[%s227 + $0x138] sm:$0xff]
        %v316 = vld [vmem:[%s227 + $0x140] sm:$0xff]
        %v317 = vld [vmem:[%s227 + $0x148] sm:$0xff]
        %v318 = vld [vmem:[%s227 + $0x150] sm:$0xff]
        %v319 = vld [vmem:[%s227 + $0x158] sm:$0xff]
        %v320 = vld [vmem:[%s227 + $0x160] sm:$0xff]
        %v321 = vld [vmem:[%s227 + $0x168] sm:$0xff]
        %v322 = vld [vmem:[%s227 + $0x170] sm:$0xff]
        %v323 = vld [vmem:[%s227 + $0x178] sm:$0xff]
        %v324 = vld [vmem:[%s227 + $0x180] sm:$0xff]
        %v325 = vld [vmem:[%s227 + $0x188] sm:$0xff]
        %v326 = vld [vmem:[%s227 + $0x190] sm:$0xff]
        %v327 = vld [vmem:[%s227 + $0x198] sm:$0xff]
        %v328 = vld [vmem:[%s227 + $0x1a0] sm:$0xff]
        %v329 = vld [vmem:[%s227 + $0x1a8] sm:$0xff]
        %v330 = vld [vmem:[%s227 + $0x1b0] sm:$0xff]
        %v331 = vld [vmem:[%s227 + $0x1b8] sm:$0xff]
        %v332 = vld [vmem:[%s227 + $0x1c0] sm:$0xff]
        %v333 = vld [vmem:[%s227 + $0x1c8] sm:$0xff]
        %v334 = vld [vmem:[%s227 + $0x1d0] sm:$0xff]
        %v335 = vld [vmem:[%s227 + $0x1d8] sm:$0xff]
        %v336 = vld [vmem:[%s227 + $0x1e0] sm:$0xff]
        %v337 = vld [vmem:[%s227 + $0x1e8] sm:$0xff]
        %v338 = vld [vmem:[%s227 + $0x1f0] sm:$0xff]
        %v339 = vld [vmem:[%s227 + $0x1f8] sm:$0xff]
        %v340 = vadd.f32 %v276, %v277
        %v341 = vadd.f32 %v340, %v278
        %v342 = vadd.f32 %v341, %v279
        %343 = vadd.xlane.f32.xlu0 %v342
        %v344 = vpop.xlane.xlu0 %343
        %v345 = vadd.f32 %v280, %v281
        %v346 = vadd.f32 %v345, %v282
        %v347 = vadd.f32 %v346, %v283
        %348 = vadd.xlane.f32.xlu0 %v347
        %v349 = vpop.xlane.xlu0 %348
        %v350 = vadd.f32 %v284, %v285
        %v351 = vadd.f32 %v350, %v286
        %v352 = vadd.f32 %v351, %v287
        %353 = vadd.xlane.f32.xlu0 %v352
        %v354 = vpop.xlane.xlu0 %353
        %v355 = vadd.f32 %v288, %v289
        %v356 = vadd.f32 %v355, %v290
        %v357 = vadd.f32 %v356, %v291
        %358 = vadd.xlane.f32.xlu0 %v357
        %v359 = vpop.xlane.xlu0 %358
        %v360 = vadd.f32 %v292, %v293
        %v361 = vadd.f32 %v360, %v294
        %v362 = vadd.f32 %v361, %v295
        %363 = vadd.xlane.f32.xlu0 %v362
        %v364 = vpop.xlane.xlu0 %363
        %v365 = vadd.f32 %v296, %v297
        %v366 = vadd.f32 %v365, %v298
        %v367 = vadd.f32 %v366, %v299
        %368 = vadd.xlane.f32.xlu0 %v367
        %v369 = vpop.xlane.xlu0 %368
        %v370 = vadd.f32 %v300, %v301
        %v371 = vadd.f32 %v370, %v302
        %v372 = vadd.f32 %v371, %v303
        %373 = vadd.xlane.f32.xlu0 %v372
        %v374 = vpop.xlane.xlu0 %373
        %v375 = vadd.f32 %v304, %v305
        %v376 = vadd.f32 %v375, %v306
        %v377 = vadd.f32 %v376, %v307
        %378 = vadd.xlane.f32.xlu0 %v377
        %v379 = vpop.xlane.xlu0 %378
        %v380 = vadd.f32 %v308, %v309
        %v381 = vadd.f32 %v380, %v310
        %v382 = vadd.f32 %v381, %v311
        %383 = vadd.xlane.f32.xlu0 %v382
        %v384 = vpop.xlane.xlu0 %383
        %v385 = vadd.f32 %v312, %v313
        %v386 = vadd.f32 %v385, %v314
        %v387 = vadd.f32 %v386, %v315
        %388 = vadd.xlane.f32.xlu0 %v387
        %v389 = vpop.xlane.xlu0 %388
        %v390 = vadd.f32 %v316, %v317
        %v391 = vadd.f32 %v390, %v318
        %v392 = vadd.f32 %v391, %v319
        %393 = vadd.xlane.f32.xlu0 %v392
        %v394 = vpop.xlane.xlu0 %393
        %v395 = vadd.f32 %v320, %v321
        %v396 = vadd.f32 %v395, %v322
        %v397 = vadd.f32 %v396, %v323
        %398 = vadd.xlane.f32.xlu0 %v397
        %v399 = vpop.xlane.xlu0 %398
        %v400 = vadd.f32 %v324, %v325
        %v401 = vadd.f32 %v400, %v326
        %v402 = vadd.f32 %v401, %v327
        %403 = vadd.xlane.f32.xlu0 %v402
        %v404 = vpop.xlane.xlu0 %403
        %v405 = vadd.f32 %v328, %v329
        %v406 = vadd.f32 %v405, %v330
        %v407 = vadd.f32 %v406, %v331
        %408 = vadd.xlane.f32.xlu0 %v407
        %v409 = vpop.xlane.xlu0 %408
        %v410 = vadd.f32 %v332, %v333
        %v411 = vadd.f32 %v410, %v334
        %v412 = vadd.f32 %v411, %v335
        %413 = vadd.xlane.f32.xlu0 %v412
        %v414 = vpop.xlane.xlu0 %413
        %v415 = vadd.f32 %v336, %v337
        %v416 = vadd.f32 %v415, %v338
        %v417 = vadd.f32 %v416, %v339
        %418 = vadd.xlane.f32.xlu0 %v417
        %v419 = vpop.xlane.xlu0 %418
        %v420 = vmul.f32 %v276, %v276
        %v421 = vmul.f32 %v277, %v277
        %v422 = vmul.f32 %v278, %v278
        %v423 = vmul.f32 %v279, %v279
        %v424 = vmul.f32 %v280, %v280
        %v425 = vmul.f32 %v281, %v281
        %v426 = vmul.f32 %v282, %v282
        %v427 = vmul.f32 %v283, %v283
        %v428 = vmul.f32 %v284, %v284
        %v429 = vmul.f32 %v285, %v285
        %v430 = vmul.f32 %v286, %v286
        %v431 = vmul.f32 %v287, %v287
        %v432 = vmul.f32 %v288, %v288
        %v433 = vmul.f32 %v289, %v289
        %v434 = vmul.f32 %v290, %v290
        %v435 = vmul.f32 %v291, %v291
        %v436 = vmul.f32 %v292, %v292
        %v437 = vmul.f32 %v293, %v293
        %v438 = vmul.f32 %v294, %v294
        %v439 = vmul.f32 %v295, %v295
        %v440 = vmul.f32 %v296, %v296
        %v441 = vmul.f32 %v297, %v297
        %v442 = vmul.f32 %v298, %v298
        %v443 = vmul.f32 %v299, %v299
        %v444 = vmul.f32 %v300, %v300
        %v445 = vmul.f32 %v301, %v301
        %v446 = vmul.f32 %v302, %v302
        %v447 = vmul.f32 %v303, %v303
        %v448 = vmul.f32 %v304, %v304
        %v449 = vmul.f32 %v305, %v305
        %v450 = vmul.f32 %v306, %v306
        %v451 = vmul.f32 %v307, %v307
        %v452 = vmul.f32 %v308, %v308
        %v453 = vmul.f32 %v309, %v309
        %v454 = vmul.f32 %v310, %v310
        %v455 = vmul.f32 %v311, %v311
        %v456 = vmul.f32 %v312, %v312
        %v457 = vmul.f32 %v313, %v313
        %v458 = vmul.f32 %v314, %v314
        %v459 = vmul.f32 %v315, %v315
        %v460 = vmul.f32 %v316, %v316
        %v461 = vmul.f32 %v317, %v317
        %v462 = vmul.f32 %v318, %v318
        %v463 = vmul.f32 %v319, %v319
        %v464 = vmul.f32 %v320, %v320
        %v465 = vmul.f32 %v321, %v321
        %v466 = vmul.f32 %v322, %v322
        %v467 = vmul.f32 %v323, %v323
        %v468 = vmul.f32 %v324, %v324
        %v469 = vmul.f32 %v325, %v325
        %v470 = vmul.f32 %v326, %v326
        %v471 = vmul.f32 %v327, %v327
        %v472 = vmul.f32 %v328, %v328
        %v473 = vmul.f32 %v329, %v329
        %v474 = vmul.f32 %v330, %v330
        %v475 = vmul.f32 %v331, %v331
        %v476 = vmul.f32 %v332, %v332
        %v477 = vmul.f32 %v333, %v333
        %v478 = vmul.f32 %v334, %v334
        %v479 = vmul.f32 %v335, %v335
        %v480 = vmul.f32 %v336, %v336
        %v481 = vmul.f32 %v337, %v337
        %v482 = vmul.f32 %v338, %v338
        %v483 = vmul.f32 %v339, %v339
        %v484 = vadd.f32 %v420, %v421
        %v485 = vadd.f32 %v484, %v422
        %v486 = vadd.f32 %v485, %v423
        %487 = vadd.xlane.f32.xlu0 %v486
        %v488 = vpop.xlane.xlu0 %487
        %v489 = vadd.f32 %v424, %v425
        %v490 = vadd.f32 %v489, %v426
        %v491 = vadd.f32 %v490, %v427
        %492 = vadd.xlane.f32.xlu0 %v491
        %v493 = vpop.xlane.xlu0 %492
        %v494 = vadd.f32 %v428, %v429
        %v495 = vadd.f32 %v494, %v430
        %v496 = vadd.f32 %v495, %v431
        %497 = vadd.xlane.f32.xlu0 %v496
        %v498 = vpop.xlane.xlu0 %497
        %v499 = vadd.f32 %v432, %v433
        %v500 = vadd.f32 %v499, %v434
        %v501 = vadd.f32 %v500, %v435
        %502 = vadd.xlane.f32.xlu0 %v501
        %v503 = vpop.xlane.xlu0 %502
        %v504 = vadd.f32 %v436, %v437
        %v505 = vadd.f32 %v504, %v438
        %v506 = vadd.f32 %v505, %v439
        %507 = vadd.xlane.f32.xlu0 %v506
        %v508 = vpop.xlane.xlu0 %507
        %v509 = vadd.f32 %v440, %v441
        %v510 = vadd.f32 %v509, %v442
        %v511 = vadd.f32 %v510, %v443
        %512 = vadd.xlane.f32.xlu0 %v511
        %v513 = vpop.xlane.xlu0 %512
        %v514 = vadd.f32 %v444, %v445
        %v515 = vadd.f32 %v514, %v446
        %v516 = vadd.f32 %v515, %v447
        %517 = vadd.xlane.f32.xlu0 %v516
        %v518 = vpop.xlane.xlu0 %517
        %v519 = vadd.f32 %v448, %v449
        %v520 = vadd.f32 %v519, %v450
        %v521 = vadd.f32 %v520, %v451
        %522 = vadd.xlane.f32.xlu0 %v521
        %v523 = vpop.xlane.xlu0 %522
        %v524 = vadd.f32 %v452, %v453
        %v525 = vadd.f32 %v524, %v454
        %v526 = vadd.f32 %v525, %v455
        %527 = vadd.xlane.f32.xlu0 %v526
        %v528 = vpop.xlane.xlu0 %527
        %v529 = vadd.f32 %v456, %v457
        %v530 = vadd.f32 %v529, %v458
        %v531 = vadd.f32 %v530, %v459
        %532 = vadd.xlane.f32.xlu0 %v531
        %v533 = vpop.xlane.xlu0 %532
        %v534 = vadd.f32 %v460, %v461
        %v535 = vadd.f32 %v534, %v462
        %v536 = vadd.f32 %v535, %v463
        %537 = vadd.xlane.f32.xlu0 %v536
        %v538 = vpop.xlane.xlu0 %537
        %v539 = vadd.f32 %v464, %v465
        %v540 = vadd.f32 %v539, %v466
        %v541 = vadd.f32 %v540, %v467
        %542 = vadd.xlane.f32.xlu0 %v541
        %v543 = vpop.xlane.xlu0 %542
        %v544 = vadd.f32 %v468, %v469
        %v545 = vadd.f32 %v544, %v470
        %v546 = vadd.f32 %v545, %v471
        %547 = vadd.xlane.f32.xlu0 %v546
        %v548 = vpop.xlane.xlu0 %547
        %v549 = vadd.f32 %v472, %v473
        %v550 = vadd.f32 %v549, %v474
        %v551 = vadd.f32 %v550, %v475
        %552 = vadd.xlane.f32.xlu0 %v551
        %v553 = vpop.xlane.xlu0 %552
        %v554 = vadd.f32 %v476, %v477
        %v555 = vadd.f32 %v554, %v478
        %v556 = vadd.f32 %v555, %v479
        %557 = vadd.xlane.f32.xlu0 %v556
        %v558 = vpop.xlane.xlu0 %557
        %v559 = vadd.f32 %v480, %v481
        %v560 = vadd.f32 %v559, %v482
        %v561 = vadd.f32 %v560, %v483
        %562 = vadd.xlane.f32.xlu0 %v561
        %v563 = vpop.xlane.xlu0 %562
        %v564 = vmul.f32 %v344, 0.001953125
        %v565 = vmul.f32 %v349, 0.001953125
        %v566 = vmul.f32 %v354, 0.001953125
        %v567 = vmul.f32 %v359, 0.001953125
        %v568 = vmul.f32 %v364, 0.001953125
        %v569 = vmul.f32 %v369, 0.001953125
        %v570 = vmul.f32 %v374, 0.001953125
        %v571 = vmul.f32 %v379, 0.001953125
        %v572 = vmul.f32 %v384, 0.001953125
        %v573 = vmul.f32 %v389, 0.001953125
        %v574 = vmul.f32 %v394, 0.001953125
        %v575 = vmul.f32 %v399, 0.001953125
        %v576 = vmul.f32 %v404, 0.001953125
        %v577 = vmul.f32 %v409, 0.001953125
        %v578 = vmul.f32 %v414, 0.001953125
        %v579 = vmul.f32 %v419, 0.001953125
        %v580 = vmul.f32 %v488, 0.001953125
        %v581 = vmul.f32 %v493, 0.001953125
        %v582 = vmul.f32 %v498, 0.001953125
        %v583 = vmul.f32 %v503, 0.001953125
        %v584 = vmul.f32 %v508, 0.001953125
        %v585 = vmul.f32 %v513, 0.001953125
        %v586 = vmul.f32 %v518, 0.001953125
        %v587 = vmul.f32 %v523, 0.001953125
        %v588 = vmul.f32 %v528, 0.001953125
        %v589 = vmul.f32 %v533, 0.001953125
        %v590 = vmul.f32 %v538, 0.001953125
        %v591 = vmul.f32 %v543, 0.001953125
        %v592 = vmul.f32 %v548, 0.001953125
        %v593 = vmul.f32 %v553, 0.001953125
        %v594 = vmul.f32 %v558, 0.001953125
        %v595 = vmul.f32 %v563, 0.001953125
        %v596 = vmul.f32 %v564, %v564
        %v597 = vmul.f32 %v565, %v565
        %v598 = vmul.f32 %v566, %v566
        %v599 = vmul.f32 %v567, %v567
        %v600 = vmul.f32 %v568, %v568
        %v601 = vmul.f32 %v569, %v569
        %v602 = vmul.f32 %v570, %v570
        %v603 = vmul.f32 %v571, %v571
        %v604 = vmul.f32 %v572, %v572
        %v605 = vmul.f32 %v573, %v573
        %v606 = vmul.f32 %v574, %v574
        %v607 = vmul.f32 %v575, %v575
        %v608 = vmul.f32 %v576, %v576
        %v609 = vmul.f32 %v577, %v577
        %v610 = vmul.f32 %v578, %v578
        %v611 = vmul.f32 %v579, %v579
        %v612 = vsub.f32 %v580, %v596
        %v613 = vsub.f32 %v581, %v597
        %v614 = vsub.f32 %v582, %v598
        %v615 = vsub.f32 %v583, %v599
        %v616 = vsub.f32 %v584, %v600
        %v617 = vsub.f32 %v585, %v601
        %v618 = vsub.f32 %v586, %v602
        %v619 = vsub.f32 %v587, %v603
        %v620 = vsub.f32 %v588, %v604
        %v621 = vsub.f32 %v589, %v605
        %v622 = vsub.f32 %v590, %v606
        %v623 = vsub.f32 %v591, %v607
        %v624 = vsub.f32 %v592, %v608
        %v625 = vsub.f32 %v593, %v609
        %v626 = vsub.f32 %v594, %v610
        %v627 = vsub.f32 %v595, %v611
        %v628 = vadd.f32 %v612, 1e-05
        %v629 = vadd.f32 %v613, 1e-05
        %v630 = vadd.f32 %v614, 1e-05
        %v631 = vadd.f32 %v615, 1e-05
        %v632 = vadd.f32 %v616, 1e-05
        %v633 = vadd.f32 %v617, 1e-05
        %v634 = vadd.f32 %v618, 1e-05
        %v635 = vadd.f32 %v619, 1e-05
        %v636 = vadd.f32 %v620, 1e-05
        %v637 = vadd.f32 %v621, 1e-05
        %v638 = vadd.f32 %v622, 1e-05
        %v639 = vadd.f32 %v623, 1e-05
        %v640 = vadd.f32 %v624, 1e-05
        %v641 = vadd.f32 %v625, 1e-05
        %v642 = vadd.f32 %v626, 1e-05
        %v643 = vadd.f32 %v627, 1e-05
        %v644 = vrsqrt.pop %v628
        %v645 = vrsqrt.pop %v629
        %v646 = vrsqrt.pop %v630
        %v647 = vrsqrt.pop %v631
        %v648 = vrsqrt.pop %v632
        %v649 = vrsqrt.pop %v633
        %v650 = vrsqrt.pop %v634
        %v651 = vrsqrt.pop %v635
        %v652 = vrsqrt.pop %v636
        %v653 = vrsqrt.pop %v637
        %v654 = vrsqrt.pop %v638
        %v655 = vrsqrt.pop %v639
        %v656 = vrsqrt.pop %v640
        %v657 = vrsqrt.pop %v641
        %v658 = vrsqrt.pop %v642
        %v659 = vrsqrt.pop %v643
        %v660 = vsub.f32 %v276, %v564
        %v661 = vsub.f32 %v277, %v564
        %v662 = vsub.f32 %v278, %v564
        %v663 = vsub.f32 %v279, %v564
        %v664 = vsub.f32 %v280, %v565
        %v665 = vsub.f32 %v281, %v565
        %v666 = vsub.f32 %v282, %v565
        %v667 = vsub.f32 %v283, %v565
        %v668 = vsub.f32 %v284, %v566
        %v669 = vsub.f32 %v285, %v566
        %v670 = vsub.f32 %v286, %v566
        %v671 = vsub.f32 %v287, %v566
        %v672 = vsub.f32 %v288, %v567
        %v673 = vsub.f32 %v289, %v567
        %v674 = vsub.f32 %v290, %v567
        %v675 = vsub.f32 %v291, %v567
        %v676 = vsub.f32 %v292, %v568
        %v677 = vsub.f32 %v293, %v568
        %v678 = vsub.f32 %v294, %v568
        %v679 = vsub.f32 %v295, %v568
        %v680 = vsub.f32 %v296, %v569
        %v681 = vsub.f32 %v297, %v569
        %v682 = vsub.f32 %v298, %v569
        %v683 = vsub.f32 %v299, %v569
        %v684 = vsub.f32 %v300, %v570
        %v685 = vsub.f32 %v301, %v570
        %v686 = vsub.f32 %v302, %v570
        %v687 = vsub.f32 %v303, %v570
        %v688 = vsub.f32 %v304, %v571
        %v689 = vsub.f32 %v305, %v571
        %v690 = vsub.f32 %v306, %v571
        %v691 = vsub.f32 %v307, %v571
        %v692 = vsub.f32 %v308, %v572
        %v693 = vsub.f32 %v309, %v572
        %v694 = vsub.f32 %v310, %v572
        %v695 = vsub.f32 %v311, %v572
        %v696 = vsub.f32 %v312, %v573
        %v697 = vsub.f32 %v313, %v573
        %v698 = vsub.f32 %v314, %v573
        %v699 = vsub.f32 %v315, %v573
        %v700 = vsub.f32 %v316, %v574
        %v701 = vsub.f32 %v317, %v574
        %v702 = vsub.f32 %v318, %v574
        %v703 = vsub.f32 %v319, %v574
        %v704 = vsub.f32 %v320, %v575
        %v705 = vsub.f32 %v321, %v575
        %v706 = vsub.f32 %v322, %v575
        %v707 = vsub.f32 %v323, %v575
        %v708 = vsub.f32 %v324, %v576
        %v709 = vsub.f32 %v325, %v576
        %v710 = vsub.f32 %v326, %v576
        %v711 = vsub.f32 %v327, %v576
        %v712 = vsub.f32 %v328, %v577
        %v713 = vsub.f32 %v329, %v577
        %v714 = vsub.f32 %v330, %v577
        %v715 = vsub.f32 %v331, %v577
        %v716 = vsub.f32 %v332, %v578
        %v717 = vsub.f32 %v333, %v578
        %v718 = vsub.f32 %v334, %v578
        %v719 = vsub.f32 %v335, %v578
        %v720 = vsub.f32 %v336, %v579
        %v721 = vsub.f32 %v337, %v579
        %v722 = vsub.f32 %v338, %v579
        %v723 = vsub.f32 %v339, %v579
        %v724 = vmul.f32 %v660, %v644
        %v725 = vmul.f32 %v661, %v644
        %v726 = vmul.f32 %v662, %v644
        %v727 = vmul.f32 %v663, %v644
        %v728 = vmul.f32 %v664, %v645
        %v729 = vmul.f32 %v665, %v645
        %v730 = vmul.f32 %v666, %v645
        %v731 = vmul.f32 %v667, %v645
        %v732 = vmul.f32 %v668, %v646
        %v733 = vmul.f32 %v669, %v646
        %v734 = vmul.f32 %v670, %v646
        %v735 = vmul.f32 %v671, %v646
        %v736 = vmul.f32 %v672, %v647
        %v737 = vmul.f32 %v673, %v647
        %v738 = vmul.f32 %v674, %v647
        %v739 = vmul.f32 %v675, %v647
        %v740 = vmul.f32 %v676, %v648
        %v741 = vmul.f32 %v677, %v648
        %v742 = vmul.f32 %v678, %v648
        %v743 = vmul.f32 %v679, %v648
        %v744 = vmul.f32 %v680, %v649
        %v745 = vmul.f32 %v681, %v649
        %v746 = vmul.f32 %v682, %v649
        %v747 = vmul.f32 %v683, %v649
        %v748 = vmul.f32 %v684, %v650
        %v749 = vmul.f32 %v685, %v650
        %v750 = vmul.f32 %v686, %v650
        %v751 = vmul.f32 %v687, %v650
        %v752 = vmul.f32 %v688, %v651
        %v753 = vmul.f32 %v689, %v651
        %v754 = vmul.f32 %v690, %v651
        %v755 = vmul.f32 %v691, %v651
        %v756 = vmul.f32 %v692, %v652
        %v757 = vmul.f32 %v693, %v652
        %v758 = vmul.f32 %v694, %v652
        %v759 = vmul.f32 %v695, %v652
        %v760 = vmul.f32 %v696, %v653
        %v761 = vmul.f32 %v697, %v653
        %v762 = vmul.f32 %v698, %v653
        %v763 = vmul.f32 %v699, %v653
        %v764 = vmul.f32 %v700, %v654
        %v765 = vmul.f32 %v701, %v654
        %v766 = vmul.f32 %v702, %v654
        %v767 = vmul.f32 %v703, %v654
        %v768 = vmul.f32 %v704, %v655
        %v769 = vmul.f32 %v705, %v655
        %v770 = vmul.f32 %v706, %v655
        %v771 = vmul.f32 %v707, %v655
        %v772 = vmul.f32 %v708, %v656
        %v773 = vmul.f32 %v709, %v656
        %v774 = vmul.f32 %v710, %v656
        %v775 = vmul.f32 %v711, %v656
        %v776 = vmul.f32 %v712, %v657
        %v777 = vmul.f32 %v713, %v657
        %v778 = vmul.f32 %v714, %v657
        %v779 = vmul.f32 %v715, %v657
        %v780 = vmul.f32 %v716, %v658
        %v781 = vmul.f32 %v717, %v658
        %v782 = vmul.f32 %v718, %v658
        %v783 = vmul.f32 %v719, %v658
        %v784 = vmul.f32 %v720, %v659
        %v785 = vmul.f32 %v721, %v659
        %v786 = vmul.f32 %v722, %v659
        %v787 = vmul.f32 %v723, %v659
        %v788 = vld [vmem:[#allocation5] sm:$0xf]
        %v790 = vlaneseq
        %v791 = vshrl.u32 %v790, 7
        %v792 = vsub.s32 0, %v791
        %v793 = vrot.slane %v788, %v792
        %v794 = vlaneseq
        %v795 = vshrl.u32 %v794, 7
        %v796 = vsub.s32 1, %v795
        %v797 = vrot.slane %v788, %v796
        %v798 = vlaneseq
        %v799 = vshrl.u32 %v798, 7
        %v800 = vsub.s32 2, %v799
        %v801 = vrot.slane %v788, %v800
        %v802 = vlaneseq
        %v803 = vshrl.u32 %v802, 7
        %v804 = vsub.s32 3, %v803
        %v805 = vrot.slane %v788, %v804
        %v810 = vmul.f32 %v724, %v793
        %v811 = vmul.f32 %v725, %v797
        %v812 = vmul.f32 %v726, %v801
        %v813 = vmul.f32 %v727, %v805
        %v814 = vmul.f32 %v728, %v793
        %v815 = vmul.f32 %v729, %v797
        %v816 = vmul.f32 %v730, %v801
        %v817 = vmul.f32 %v731, %v805
        %v818 = vmul.f32 %v732, %v793
        %v819 = vmul.f32 %v733, %v797
        %v820 = vmul.f32 %v734, %v801
        %v821 = vmul.f32 %v735, %v805
        %v822 = vmul.f32 %v736, %v793
        %v823 = vmul.f32 %v737, %v797
        %v824 = vmul.f32 %v738, %v801
        %v825 = vmul.f32 %v739, %v805
        %v826 = vmul.f32 %v740, %v793
        %v827 = vmul.f32 %v741, %v797
        %v828 = vmul.f32 %v742, %v801
        %v829 = vmul.f32 %v743, %v805
        %v830 = vmul.f32 %v744, %v793
        %v831 = vmul.f32 %v745, %v797
        %v832 = vmul.f32 %v746, %v801
        %v833 = vmul.f32 %v747, %v805
        %v834 = vmul.f32 %v748, %v793
        %v835 = vmul.f32 %v749, %v797
        %v836 = vmul.f32 %v750, %v801
        %v837 = vmul.f32 %v751, %v805
        %v838 = vmul.f32 %v752, %v793
        %v839 = vmul.f32 %v753, %v797
        %v840 = vmul.f32 %v754, %v801
        %v841 = vmul.f32 %v755, %v805
        %v842 = vmul.f32 %v756, %v793
        %v843 = vmul.f32 %v757, %v797
        %v844 = vmul.f32 %v758, %v801
        %v845 = vmul.f32 %v759, %v805
        %v846 = vmul.f32 %v760, %v793
        %v847 = vmul.f32 %v761, %v797
        %v848 = vmul.f32 %v762, %v801
        %v849 = vmul.f32 %v763, %v805
        %v850 = vmul.f32 %v764, %v793
        %v851 = vmul.f32 %v765, %v797
        %v852 = vmul.f32 %v766, %v801
        %v853 = vmul.f32 %v767, %v805
        %v854 = vmul.f32 %v768, %v793
        %v855 = vmul.f32 %v769, %v797
        %v856 = vmul.f32 %v770, %v801
        %v857 = vmul.f32 %v771, %v805
        %v858 = vmul.f32 %v772, %v793
        %v859 = vmul.f32 %v773, %v797
        %v860 = vmul.f32 %v774, %v801
        %v861 = vmul.f32 %v775, %v805
        %v862 = vmul.f32 %v776, %v793
        %v863 = vmul.f32 %v777, %v797
        %v864 = vmul.f32 %v778, %v801
        %v865 = vmul.f32 %v779, %v805
        %v866 = vmul.f32 %v780, %v793
        %v867 = vmul.f32 %v781, %v797
        %v868 = vmul.f32 %v782, %v801
        %v869 = vmul.f32 %v783, %v805
        %v870 = vmul.f32 %v784, %v793
        %v871 = vmul.f32 %v785, %v797
        %v872 = vmul.f32 %v786, %v801
        %v873 = vmul.f32 %v787, %v805
        %v874 = vld [vmem:[#allocation7] sm:$0xf]
        %v876 = vlaneseq
        %v877 = vshrl.u32 %v876, 7
        %v878 = vsub.s32 0, %v877
        %v879 = vrot.slane %v874, %v878
        %v880 = vlaneseq
        %v881 = vshrl.u32 %v880, 7
        %v882 = vsub.s32 1, %v881
        %v883 = vrot.slane %v874, %v882
        %v884 = vlaneseq
        %v885 = vshrl.u32 %v884, 7
        %v886 = vsub.s32 2, %v885
        %v887 = vrot.slane %v874, %v886
        %v888 = vlaneseq
        %v889 = vshrl.u32 %v888, 7
        %v890 = vsub.s32 3, %v889
        %v891 = vrot.slane %v874, %v890
        %v896 = vadd.f32 %v810, %v879
        %v897 = vadd.f32 %v811, %v883
        %v898 = vadd.f32 %v812, %v887
        %v899 = vadd.f32 %v813, %v891
        %v900 = vadd.f32 %v814, %v879
        %v901 = vadd.f32 %v815, %v883
        %v902 = vadd.f32 %v816, %v887
        %v903 = vadd.f32 %v817, %v891
        %v904 = vadd.f32 %v818, %v879
        %v905 = vadd.f32 %v819, %v883
        %v906 = vadd.f32 %v820, %v887
        %v907 = vadd.f32 %v821, %v891
        %v908 = vadd.f32 %v822, %v879
        %v909 = vadd.f32 %v823, %v883
        %v910 = vadd.f32 %v824, %v887
        %v911 = vadd.f32 %v825, %v891
        %v912 = vadd.f32 %v826, %v879
        %v913 = vadd.f32 %v827, %v883
        %v914 = vadd.f32 %v828, %v887
        %v915 = vadd.f32 %v829, %v891
        %v916 = vadd.f32 %v830, %v879
        %v917 = vadd.f32 %v831, %v883
        %v918 = vadd.f32 %v832, %v887
        %v919 = vadd.f32 %v833, %v891
        %v920 = vadd.f32 %v834, %v879
        %v921 = vadd.f32 %v835, %v883
        %v922 = vadd.f32 %v836, %v887
        %v923 = vadd.f32 %v837, %v891
        %v924 = vadd.f32 %v838, %v879
        %v925 = vadd.f32 %v839, %v883
        %v926 = vadd.f32 %v840, %v887
        %v927 = vadd.f32 %v841, %v891
        %v928 = vadd.f32 %v842, %v879
        %v929 = vadd.f32 %v843, %v883
        %v930 = vadd.f32 %v844, %v887
        %v931 = vadd.f32 %v845, %v891
        %v932 = vadd.f32 %v846, %v879
        %v933 = vadd.f32 %v847, %v883
        %v934 = vadd.f32 %v848, %v887
        %v935 = vadd.f32 %v849, %v891
        %v936 = vadd.f32 %v850, %v879
        %v937 = vadd.f32 %v851, %v883
        %v938 = vadd.f32 %v852, %v887
        %v939 = vadd.f32 %v853, %v891
        %v940 = vadd.f32 %v854, %v879
        %v941 = vadd.f32 %v855, %v883
        %v942 = vadd.f32 %v856, %v887
        %v943 = vadd.f32 %v857, %v891
        %v944 = vadd.f32 %v858, %v879
        %v945 = vadd.f32 %v859, %v883
        %v946 = vadd.f32 %v860, %v887
        %v947 = vadd.f32 %v861, %v891
        %v948 = vadd.f32 %v862, %v879
        %v949 = vadd.f32 %v863, %v883
        %v950 = vadd.f32 %v864, %v887
        %v951 = vadd.f32 %v865, %v891
        %v952 = vadd.f32 %v866, %v879
        %v953 = vadd.f32 %v867, %v883
        %v954 = vadd.f32 %v868, %v887
        %v955 = vadd.f32 %v869, %v891
        %v956 = vadd.f32 %v870, %v879
        %v957 = vadd.f32 %v871, %v883
        %v958 = vadd.f32 %v872, %v887
        %v959 = vadd.f32 %v873, %v891
        %v960 = vpack.c.bf16 %v900, %v896
        %v961 = vpack.c.bf16 %v901, %v897
        %v962 = vpack.c.bf16 %v902, %v898
        %v963 = vpack.c.bf16 %v903, %v899
        %v964 = vpack.c.bf16 %v908, %v904
        %v965 = vpack.c.bf16 %v909, %v905
        %v966 = vpack.c.bf16 %v910, %v906
        %v967 = vpack.c.bf16 %v911, %v907
        %v968 = vpack.c.bf16 %v916, %v912
        %v969 = vpack.c.bf16 %v917, %v913
        %v970 = vpack.c.bf16 %v918, %v914
        %v971 = vpack.c.bf16 %v919, %v915
        %v972 = vpack.c.bf16 %v924, %v920
        %v973 = vpack.c.bf16 %v925, %v921
        %v974 = vpack.c.bf16 %v926, %v922
        %v975 = vpack.c.bf16 %v927, %v923
        %v976 = vpack.c.bf16 %v932, %v928
        %v977 = vpack.c.bf16 %v933, %v929
        %v978 = vpack.c.bf16 %v934, %v930
        %v979 = vpack.c.bf16 %v935, %v931
        %v980 = vpack.c.bf16 %v940, %v936
        %v981 = vpack.c.bf16 %v941, %v937
        %v982 = vpack.c.bf16 %v942, %v938
        %v983 = vpack.c.bf16 %v943, %v939
        %v984 = vpack.c.bf16 %v948, %v944
        %v985 = vpack.c.bf16 %v949, %v945
        %v986 = vpack.c.bf16 %v950, %v946
        %v987 = vpack.c.bf16 %v951, %v947
        %v988 = vpack.c.bf16 %v956, %v952
        %v989 = vpack.c.bf16 %v957, %v953
        %v990 = vpack.c.bf16 %v958, %v954
        %v991 = vpack.c.bf16 %v959, %v955
        %v992 = vld [vmem:[#allocation8] sm:$0xff]
        %v993 = vld [vmem:[#allocation8 + $0x8] sm:$0xff]
        %v994 = vld [vmem:[#allocation8 + $0x10] sm:$0xff]
        %v995 = vld [vmem:[#allocation8 + $0x18] sm:$0xff]
        %v996 = vld [vmem:[#allocation8 + $0x20] sm:$0xff]
        %v997 = vld [vmem:[#allocation8 + $0x28] sm:$0xff]
        %v998 = vld [vmem:[#allocation8 + $0x30] sm:$0xff]
        %v999 = vld [vmem:[#allocation8 + $0x38] sm:$0xff]
        %v1000 = vld [vmem:[#allocation8 + $0x40] sm:$0xff]
        %v1001 = vld [vmem:[#allocation8 + $0x48] sm:$0xff]
        %v1002 = vld [vmem:[#allocation8 + $0x50] sm:$0xff]
        %v1003 = vld [vmem:[#allocation8 + $0x58] sm:$0xff]
        %v1004 = vld [vmem:[#allocation8 + $0x60] sm:$0xff]
        %v1005 = vld [vmem:[#allocation8 + $0x68] sm:$0xff]
        %v1006 = vld [vmem:[#allocation8 + $0x70] sm:$0xff]
        %v1007 = vld [vmem:[#allocation8 + $0x78] sm:$0xff]
        %v1008 = vld [vmem:[#allocation8 + $0x80] sm:$0xff]
        %v1009 = vld [vmem:[#allocation8 + $0x88] sm:$0xff]
        %v1010 = vld [vmem:[#allocation8 + $0x90] sm:$0xff]
        %v1011 = vld [vmem:[#allocation8 + $0x98] sm:$0xff]
        %v1012 = vld [vmem:[#allocation8 + $0xa0] sm:$0xff]
        %v1013 = vld [vmem:[#allocation8 + $0xa8] sm:$0xff]
        %v1014 = vld [vmem:[#allocation8 + $0xb0] sm:$0xff]
        %v1015 = vld [vmem:[#allocation8 + $0xb8] sm:$0xff]
        %v1016 = vld [vmem:[#allocation8 + $0xc0] sm:$0xff]
        %v1017 = vld [vmem:[#allocation8 + $0xc8] sm:$0xff]
        %v1018 = vld [vmem:[#allocation8 + $0xd0] sm:$0xff]
        %v1019 = vld [vmem:[#allocation8 + $0xd8] sm:$0xff]
        %v1020 = vld [vmem:[#allocation8 + $0xe0] sm:$0xff]
        %v1021 = vld [vmem:[#allocation8 + $0xe8] sm:$0xff]
        %v1022 = vld [vmem:[#allocation8 + $0xf0] sm:$0xff]
        %v1023 = vld [vmem:[#allocation8 + $0xf8] sm:$0xff]
        %v1024 = vld [vmem:[#allocation8 + $0x100] sm:$0xff]
        %v1025 = vld [vmem:[#allocation8 + $0x108] sm:$0xff]
        %v1026 = vld [vmem:[#allocation8 + $0x110] sm:$0xff]
        %v1027 = vld [vmem:[#allocation8 + $0x118] sm:$0xff]
        %v1028 = vld [vmem:[#allocation8 + $0x120] sm:$0xff]
        %v1029 = vld [vmem:[#allocation8 + $0x128] sm:$0xff]
        %v1030 = vld [vmem:[#allocation8 + $0x130] sm:$0xff]
        %v1031 = vld [vmem:[#allocation8 + $0x138] sm:$0xff]
        %v1032 = vld [vmem:[#allocation8 + $0x140] sm:$0xff]
        %v1033 = vld [vmem:[#allocation8 + $0x148] sm:$0xff]
        %v1034 = vld [vmem:[#allocation8 + $0x150] sm:$0xff]
        %v1035 = vld [vmem:[#allocation8 + $0x158] sm:$0xff]
        %v1036 = vld [vmem:[#allocation8 + $0x160] sm:$0xff]
        %v1037 = vld [vmem:[#allocation8 + $0x168] sm:$0xff]
        %v1038 = vld [vmem:[#allocation8 + $0x170] sm:$0xff]
        %v1039 = vld [vmem:[#allocation8 + $0x178] sm:$0xff]
        %v1040 = vld [vmem:[#allocation8 + $0x180] sm:$0xff]
        %v1041 = vld [vmem:[#allocation8 + $0x188] sm:$0xff]
        %v1042 = vld [vmem:[#allocation8 + $0x190] sm:$0xff]
        %v1043 = vld [vmem:[#allocation8 + $0x198] sm:$0xff]
        %v1044 = vld [vmem:[#allocation8 + $0x1a0] sm:$0xff]
        %v1045 = vld [vmem:[#allocation8 + $0x1a8] sm:$0xff]
        %v1046 = vld [vmem:[#allocation8 + $0x1b0] sm:$0xff]
        %v1047 = vld [vmem:[#allocation8 + $0x1b8] sm:$0xff]
        %v1048 = vld [vmem:[#allocation8 + $0x1c0] sm:$0xff]
        %v1049 = vld [vmem:[#allocation8 + $0x1c8] sm:$0xff]
        %v1050 = vld [vmem:[#allocation8 + $0x1d0] sm:$0xff]
        %v1051 = vld [vmem:[#allocation8 + $0x1d8] sm:$0xff]
        %v1052 = vld [vmem:[#allocation8 + $0x1e0] sm:$0xff]
        %v1053 = vld [vmem:[#allocation8 + $0x1e8] sm:$0xff]
        %v1054 = vld [vmem:[#allocation8 + $0x1f0] sm:$0xff]
        %v1055 = vld [vmem:[#allocation8 + $0x1f8] sm:$0xff]
        %v1056 = vpack.c.bf16 %v993, %v992
        %v1057 = vpack.c.bf16 %v995, %v994
        %v1058 = vpack.c.bf16 %v997, %v996
        %v1059 = vpack.c.bf16 %v999, %v998
        %v1060 = vpack.c.bf16 %v1001, %v1000
        %v1061 = vpack.c.bf16 %v1003, %v1002
        %v1062 = vpack.c.bf16 %v1005, %v1004
        %v1063 = vpack.c.bf16 %v1007, %v1006
        %v1064 = vpack.c.bf16 %v1009, %v1008
        %v1065 = vpack.c.bf16 %v1011, %v1010
        %v1066 = vpack.c.bf16 %v1013, %v1012
        %v1067 = vpack.c.bf16 %v1015, %v1014
        %v1068 = vpack.c.bf16 %v1017, %v1016
        %v1069 = vpack.c.bf16 %v1019, %v1018
        %v1070 = vpack.c.bf16 %v1021, %v1020
        %v1071 = vpack.c.bf16 %v1023, %v1022
        %v1072 = vpack.c.bf16 %v1025, %v1024
        %v1073 = vpack.c.bf16 %v1027, %v1026
        %v1074 = vpack.c.bf16 %v1029, %v1028
        %v1075 = vpack.c.bf16 %v1031, %v1030
        %v1076 = vpack.c.bf16 %v1033, %v1032
        %v1077 = vpack.c.bf16 %v1035, %v1034
        %v1078 = vpack.c.bf16 %v1037, %v1036
        %v1079 = vpack.c.bf16 %v1039, %v1038
        %v1080 = vpack.c.bf16 %v1041, %v1040
        %v1081 = vpack.c.bf16 %v1043, %v1042
        %v1082 = vpack.c.bf16 %v1045, %v1044
        %v1083 = vpack.c.bf16 %v1047, %v1046
        %v1084 = vpack.c.bf16 %v1049, %v1048
        %v1085 = vpack.c.bf16 %v1051, %v1050
        %v1086 = vpack.c.bf16 %v1053, %v1052
        %v1087 = vpack.c.bf16 %v1055, %v1054
        %1088 = vmatprep.subr.bf16.mxu0 0
        %1089 = vmatpush1.bf16.msra.mxu0 %v1056
        %1090 = vmatprep.subr.bf16.mxu0 0
        %1091 = vmatpush1.bf16.msra.mxu0 %v1057
        %1092 = vmatprep.subr.bf16.mxu0 0
        %1093 = vmatpush1.bf16.msra.mxu0 %v1058
        %1094 = vmatprep.subr.bf16.mxu0 0
        %1095 = vmatpush1.bf16.msra.mxu0 %v1059
        %1096 = vmatprep.subr.bf16.mxu0 0
        %1097 = vmatpush1.bf16.msra.mxu0 %v1060
        %1098 = vmatprep.subr.bf16.mxu0 0
        %1099 = vmatpush1.bf16.msra.mxu0 %v1061
        %1100 = vmatprep.subr.bf16.mxu0 0
        %1101 = vmatpush1.bf16.msra.mxu0 %v1062
        %1102 = vmatprep.subr.bf16.mxu0 0
        %1103 = vmatpush1.bf16.msra.mxu0 %v1063
        %1104 = vmatprep.subr.bf16.mxu0 0
        %1105 = vmatpush1.bf16.msra.mxu0 %v1064
        %1106 = vmatprep.subr.bf16.mxu0 0
        %1107 = vmatpush1.bf16.msra.mxu0 %v1065
        %1108 = vmatprep.subr.bf16.mxu0 0
        %1109 = vmatpush1.bf16.msra.mxu0 %v1066
        %1110 = vmatprep.subr.bf16.mxu0 0
        %1111 = vmatpush1.bf16.msra.mxu0 %v1067
        %1112 = vmatprep.subr.bf16.mxu0 0
        %1113 = vmatpush1.bf16.msra.mxu0 %v1068
        %1114 = vmatprep.subr.bf16.mxu0 0
        %1115 = vmatpush1.bf16.msra.mxu0 %v1069
        %1116 = vmatprep.subr.bf16.mxu0 0
        %1117 = vmatpush1.bf16.msra.mxu0 %v1070
        %1118 = vmatprep.subr.bf16.mxu0 0
        %1119 = vmatpush1.bf16.msra.mxu0 %v1071
        %1120 = vmatprep.mubr.bf16.mxu0 %v961
        %1121 = vmatmul.mubr.bf16.gmra.mrb[0].mxu0 %v960
        %v1122 = vpop.f32.mrb[0].mxu0
        %v1123 = vadd.f32 0.0, %v1122
        %v1124 = vpop.f32.mrb[0].mxu0
        %v1125 = vpop.f32.mrb[0].mxu0
        %v1126 = vadd.f32 0.0, %v1125
        %v1127 = vpop.f32.mrb[0].mxu0
        %1128 = vmatprep.mubr.bf16.mxu0 %v965
        %1129 = vmatmul.mubr.bf16.gmra.mrb[0].mxu0 %v964
        %v1130 = vpop.f32.mrb[0].mxu0
        %v1131 = vadd.f32 0.0, %v1130
        %v1132 = vpop.f32.mrb[0].mxu0
        %v1133 = vpop.f32.mrb[0].mxu0
        %v1134 = vadd.f32 0.0, %v1133
        %v1135 = vpop.f32.mrb[0].mxu0
        %1136 = vmatprep.mubr.bf16.mxu0 %v969
        %1137 = vmatmul.mubr.bf16.gmra.mrb[0].mxu0 %v968
        %v1138 = vpop.f32.mrb[0].mxu0
        %v1139 = vadd.f32 0.0, %v1138
        %v1140 = vpop.f32.mrb[0].mxu0
        %v1141 = vpop.f32.mrb[0].mxu0
        %v1142 = vadd.f32 0.0, %v1141
        %v1143 = vpop.f32.mrb[0].mxu0
        %1144 = vmatprep.mubr.bf16.mxu0 %v973
        %1145 = vmatmul.mubr.bf16.gmra.mrb[0].mxu0 %v972
        %v1146 = vpop.f32.mrb[0].mxu0
        %v1147 = vadd.f32 0.0, %v1146
        %v1148 = vpop.f32.mrb[0].mxu0
        %v1149 = vpop.f32.mrb[0].mxu0
        %v1150 = vadd.f32 0.0, %v1149
        %v1151 = vpop.f32.mrb[0].mxu0
        %1152 = vmatprep.mubr.bf16.mxu0 %v977
        %1153 = vmatmul.mubr.bf16.gmra.mrb[0].mxu0 %v976
        %v1154 = vpop.f32.mrb[0].mxu0
        %v1155 = vadd.f32 0.0, %v1154
        %v1156 = vpop.f32.mrb[0].mxu0
        %v1157 = vpop.f32.mrb[0].mxu0
        %v1158 = vadd.f32 0.0, %v1157
        %v1159 = vpop.f32.mrb[0].mxu0
        %1160 = vmatprep.mubr.bf16.mxu0 %v981
        %1161 = vmatmul.mubr.bf16.gmra.mrb[0].mxu0 %v980
        %v1162 = vpop.f32.mrb[0].mxu0
        %v1163 = vadd.f32 0.0, %v1162
        %v1164 = vpop.f32.mrb[0].mxu0
        %v1165 = vpop.f32.mrb[0].mxu0
        %v1166 = vadd.f32 0.0, %v1165
        %v1167 = vpop.f32.mrb[0].mxu0
        %1168 = vmatprep.mubr.bf16.mxu0 %v985
        %1169 = vmatmul.mubr.bf16.gmra.mrb[0].mxu0 %v984
        %v1170 = vpop.f32.mrb[0].mxu0
        %v1171 = vadd.f32 0.0, %v1170
        %v1172 = vpop.f32.mrb[0].mxu0
        %v1173 = vpop.f32.mrb[0].mxu0
        %v1174 = vadd.f32 0.0, %v1173
        %v1175 = vpop.f32.mrb[0].mxu0
        %1176 = vmatprep.mubr.bf16.mxu0 %v989
        %1177 = vmatmul.mubr.bf16.gmra.mrb[0].mxu0 %v988
        %v1178 = vpop.f32.mrb[0].mxu0
        %v1179 = vadd.f32 0.0, %v1178
        %v1180 = vpop.f32.mrb[0].mxu0
        %v1181 = vpop.f32.mrb[0].mxu0
        %v1182 = vadd.f32 0.0, %v1181
        %v1183 = vpop.f32.mrb[0].mxu0
        %1184 = vdwg.mxu0
        %1185 = vmatprep.subr.bf16.mxu0 0
        %1186 = vmatpush1.bf16.msra.mxu0 %v1072
        %1187 = vmatprep.subr.bf16.mxu0 0
        %1188 = vmatpush1.bf16.msra.mxu0 %v1073
        %1189 = vmatprep.subr.bf16.mxu0 0
        %1190 = vmatpush1.bf16.msra.mxu0 %v1074
        %1191 = vmatprep.subr.bf16.mxu0 0
        %1192 = vmatpush1.bf16.msra.mxu0 %v1075
        %1193 = vmatprep.subr.bf16.mxu0 0
        %1194 = vmatpush1.bf16.msra.mxu0 %v1076
        %1195 = vmatprep.subr.bf16.mxu0 0
        %1196 = vmatpush1.bf16.msra.mxu0 %v1077
        %1197 = vmatprep.subr.bf16.mxu0 0
        %1198 = vmatpush1.bf16.msra.mxu0 %v1078
        %1199 = vmatprep.subr.bf16.mxu0 0
        %1200 = vmatpush1.bf16.msra.mxu0 %v1079
        %1201 = vmatprep.subr.bf16.mxu0 0
        %1202 = vmatpush1.bf16.msra.mxu0 %v1080
        %1203 = vmatprep.subr.bf16.mxu0 0
        %1204 = vmatpush1.bf16.msra.mxu0 %v1081
        %1205 = vmatprep.subr.bf16.mxu0 0
        %1206 = vmatpush1.bf16.msra.mxu0 %v1082
        %1207 = vmatprep.subr.bf16.mxu0 0
        %1208 = vmatpush1.bf16.msra.mxu0 %v1083
        %1209 = vmatprep.subr.bf16.mxu0 0
        %1210 = vmatpush1.bf16.msra.mxu0 %v1084
        %1211 = vmatprep.subr.bf16.mxu0 0
        %1212 = vmatpush1.bf16.msra.mxu0 %v1085
        %1213 = vmatprep.subr.bf16.mxu0 0
        %1214 = vmatpush1.bf16.msra.mxu0 %v1086
        %1215 = vmatprep.subr.bf16.mxu0 0
        %1216 = vmatpush1.bf16.msra.mxu0 %v1087
        %1217 = vmatprep.mubr.bf16.mxu0 %v963
        %1218 = vmatmul.mubr.bf16.gmra.mrb[0].mxu0 %v962
        %v1219 = vpop.f32.mrb[0].mxu0
        %v1220 = vadd.f32 %v1123, %v1219
        %v1221 = vpop.f32.mrb[0].mxu0
        %v1222 = vpop.f32.mrb[0].mxu0
        %v1223 = vadd.f32 %v1126, %v1222
        %v1224 = vpop.f32.mrb[0].mxu0
        %1225 = vmatprep.mubr.bf16.mxu0 %v967
        %1226 = vmatmul.mubr.bf16.gmra.mrb[0].mxu0 %v966
        %v1227 = vpop.f32.mrb[0].mxu0
        %v1228 = vadd.f32 %v1131, %v1227
        %v1229 = vpop.f32.mrb[0].mxu0
        %v1230 = vpop.f32.mrb[0].mxu0
        %v1231 = vadd.f32 %v1134, %v1230
        %v1232 = vpop.f32.mrb[0].mxu0
        %1233 = vmatprep.mubr.bf16.mxu0 %v971
        %1234 = vmatmul.mubr.bf16.gmra.mrb[0].mxu0 %v970
        %v1235 = vpop.f32.mrb[0].mxu0
        %v1236 = vadd.f32 %v1139, %v1235
        %v1237 = vpop.f32.mrb[0].mxu0
        %v1238 = vpop.f32.mrb[0].mxu0
        %v1239 = vadd.f32 %v1142, %v1238
        %v1240 = vpop.f32.mrb[0].mxu0
        %1241 = vmatprep.mubr.bf16.mxu0 %v975
        %1242 = vmatmul.mubr.bf16.gmra.mrb[0].mxu0 %v974
        %v1243 = vpop.f32.mrb[0].mxu0
        %v1244 = vadd.f32 %v1147, %v1243
        %v1245 = vpop.f32.mrb[0].mxu0
        %v1246 = vpop.f32.mrb[0].mxu0
        %v1247 = vadd.f32 %v1150, %v1246
        %v1248 = vpop.f32.mrb[0].mxu0
        %1249 = vmatprep.mubr.bf16.mxu0 %v979
        %1250 = vmatmul.mubr.bf16.gmra.mrb[0].mxu0 %v978
        %v1251 = vpop.f32.mrb[0].mxu0
        %v1252 = vadd.f32 %v1155, %v1251
        %v1253 = vpop.f32.mrb[0].mxu0
        %v1254 = vpop.f32.mrb[0].mxu0
        %v1255 = vadd.f32 %v1158, %v1254
        %v1256 = vpop.f32.mrb[0].mxu0
        %1257 = vmatprep.mubr.bf16.mxu0 %v983
        %1258 = vmatmul.mubr.bf16.gmra.mrb[0].mxu0 %v982
        %v1259 = vpop.f32.mrb[0].mxu0
        %v1260 = vadd.f32 %v1163, %v1259
        %v1261 = vpop.f32.mrb[0].mxu0
        %v1262 = vpop.f32.mrb[0].mxu0
        %v1263 = vadd.f32 %v1166, %v1262
        %v1264 = vpop.f32.mrb[0].mxu0
        %1265 = vmatprep.mubr.bf16.mxu0 %v987
        %1266 = vmatmul.mubr.bf16.gmra.mrb[0].mxu0 %v986
        %v1267 = vpop.f32.mrb[0].mxu0
        %v1268 = vadd.f32 %v1171, %v1267
        %v1269 = vpop.f32.mrb[0].mxu0
        %v1270 = vpop.f32.mrb[0].mxu0
        %v1271 = vadd.f32 %v1174, %v1270
        %v1272 = vpop.f32.mrb[0].mxu0
        %1273 = vmatprep.mubr.bf16.mxu0 %v991
        %1274 = vmatmul.mubr.bf16.gmra.mrb[0].mxu0 %v990
        %v1275 = vpop.f32.mrb[0].mxu0
        %v1276 = vadd.f32 %v1179, %v1275
        %v1277 = vpop.f32.mrb[0].mxu0
        %v1278 = vpop.f32.mrb[0].mxu0
        %v1279 = vadd.f32 %v1182, %v1278
        %v1280 = vpop.f32.mrb[0].mxu0
        %1281 = vdwg.mxu0
        %1282 = vst [vmem:[%s263] sm:$0xff] %v1220
        %1283 = vst [vmem:[%s263 + $0x8] sm:$0xff] %v1223
        %1284 = vst [vmem:[%s263 + $0x10] sm:$0xff] %v1228
        %1285 = vst [vmem:[%s263 + $0x18] sm:$0xff] %v1231
        %1286 = vst [vmem:[%s263 + $0x20] sm:$0xff] %v1236
        %1287 = vst [vmem:[%s263 + $0x28] sm:$0xff] %v1239
        %1288 = vst [vmem:[%s263 + $0x30] sm:$0xff] %v1244
        %1289 = vst [vmem:[%s263 + $0x38] sm:$0xff] %v1247
        %1290 = vst [vmem:[%s263 + $0x40] sm:$0xff] %v1252
        %1291 = vst [vmem:[%s263 + $0x48] sm:$0xff] %v1255
        %1292 = vst [vmem:[%s263 + $0x50] sm:$0xff] %v1260
        %1293 = vst [vmem:[%s263 + $0x58] sm:$0xff] %v1263
        %1294 = vst [vmem:[%s263 + $0x60] sm:$0xff] %v1268
        %1295 = vst [vmem:[%s263 + $0x68] sm:$0xff] %v1271
        %1296 = vst [vmem:[%s263 + $0x70] sm:$0xff] %v1276
        %1297 = vst [vmem:[%s263 + $0x78] sm:$0xff] %v1279
        %s1298 = sand.u32 %s120, 1
        %s1299 = scalar_lea.sflag [#allocation4], %s1298
        %s1300 = sand.u32 %s120, 1
        %s1301 = smul.addr %s1300, 128
        %s1302 = scalar_lea.vmem [#allocation10], %s1301
        // Predicated region
        $region53: #{patch_merging_v2.1} parent=35 // pred_check
          %p1303 = pneg %p130
        $region54: #{patch_merging_v2.1} parent=35 // pred_check_branch
          %1305 = sbr.rel (%p1303) target = $region56
        $region55: #{patch_merging_v2.1} parent=35 // pred_region
          %s1306 = smul.u32 16, %s23
          %s1307 = ssub.s32 20, %s1306
          %p1308 = scmp.lt.s32.totalorder %s1307, 16
          %s1309 = scalar_select %p1308, %s1307, 16
          %s1310 = smul.u32 128, %s1309
          %s1312 = ssub.s32 2048, %s1310
          %1313 = vsyncadd %s1299, %s1312
          %p1314 = scmp.ne.s32.totalorder 0, %s1310
          %s1315 = smul.addr %s1306, 128
          %s1316 = scalar_lea.hbm %s4, %s1315
          %s1317 = smul.u32 8, %s1309
          %s1318 = sshll.u32 %s1302, 4
          %s1319 = int_to_ptr.vmem [resolvable:$true] %s1318
          %s1320 = sshll.u32 %s1317, 4
          %1324 = dma.vmem_to_hbm [thread:$0]  (%p1314), %s1319, %s1320, %s1316, %s1299, 128, 128, 8
        $region56: #{patch_merging_v2.1} parent=35 // pred_fallthru
          _
      $region36: #{patch_merging_v2.1} parent=5 // pred_fallthru
        _
      %p1325 = scmp.le.s32.totalorder 2, %s18
      // Predicated region
      $region57: #{patch_merging_v2.1} parent=5 // pred_check
        %p1326 = pneg %p1325
      $region58: #{patch_merging_v2.1} parent=5 // pred_check_branch
        %1328 = sbr.rel (%p1326) target = $region60
      $region59: #{patch_merging_v2.1} parent=5 // pred_region
        %s1329 = ssub.s32 %s18, 2
        // Predicated region
        $region61: #{patch_merging_v2.1} parent=59 // pred_check
          %p1330 = pneg %p136
        $region62: #{patch_merging_v2.1} parent=59 // pred_check_branch
          %1332 = sbr.rel (%p1330) target = $region64
        $region63: #{patch_merging_v2.1} parent=59 // pred_region
          %s1333 = sand.u32 %s121, 1
          %s1334 = scalar_lea.sflag [#allocation4], %s1333
          %s1335 = sand.u32 %s121, 1
          %s1336 = smul.addr %s1335, 128
          %s1337 = scalar_lea.vmem [#allocation10], %s1336
          %1338 = dma.done %s1334, 2048
        $region64: #{patch_merging_v2.1} parent=59 // pred_fallthru
          _
      $region60: #{patch_merging_v2.1} parent=5 // pred_fallthru
        _
    $region6: #{patch_merging_v2.1} parent=1 // loop_footer
      %s22 = sadd.s32 1, %s18
    $region7: #{patch_merging_v2.1} parent=1 // loop_footer_branch
      %17 = sbr.rel target = $region3
    $region8: #{patch_merging_v2.1} parent=1 // loop_exit
      _
    %1339 = vsyncpa [#allocation3], 1
    %s1340 = scalar_lea.sflag [#allocation3], 1
    %1341 = vsyncpa %s1340, 1
    %1342 = vsyncpa [#allocation6], 1
    %1343 = vsyncpa [#allocation9], 1
    %1344 = vsyncpa [#allocation4], 1
    %s1345 = scalar_lea.sflag [#allocation4], 1
    %1346 = vsyncpa %s1345, 1

</llo_original>
